<compile_context>
chip_gen: v7x
topology: tpu7x:2x2x1
jax: 0.10.0
libtpu: 0.0.40
codegen_flags: <defaults>
</compile_context>

<pallas_src>
import jax
import jax.numpy as jnp
from jax import lax
from jax.experimental import pallas as pl
from jax.experimental.pallas import tpu as pltpu

EPS = 1e-5
VMEM_LIMIT = 48 * 1024 * 1024  # safe on v5e/v6e (128 MiB phys) and v7x (64 MiB phys)


def _conv_stats_kernel(x_ref, mask_ref, w1_ref, b1_ref, w2_ref, b2_ref,
                       h_ref, sum_ref, sq_ref):
    """One batch-block: conv1+ReLU -> conv2+ReLU, plus per-block channel sum/sumsq.

    x_ref    : (Cin, F) with F = NB*(L+4); sample s' occupies lanes [s'*P, (s'+1)*P)
               laid out as [0, 0, x_0 .. x_{L-1}, 0, 0] (its own conv halo).
    mask_ref : (1, F) per-period 0/1 mask, 1 exactly at q in [1, L].
    h_ref    : (C2, F) output in the same periodic layout; valid data at q in [0, L)
               of each period, exact zeros elsewhere.
    sum_ref / sq_ref : (C2, 1) per-block partial batch statistics.
    """
    F = x_ref.shape[1]
    xp = x_ref[...]

    # conv1 + ReLU: ONE fused MXU matmul over all shifted positions.
    t1 = jnp.concatenate([xp[:, 0:F - 2], xp[:, 1:F - 1], xp[:, 2:F]], axis=0)
    h1 = jnp.maximum(
        jnp.dot(w1_ref[...], t1, preferred_element_type=jnp.float32) + b1_ref[...],
        0.0)                                                     # (C1, F-2)
    # Zero the columns that act as conv2's 'same' zero padding (and the
    # inter-sample halo columns): a single precomputed-mask multiply.
    h1 = h1 * mask_ref[:, 0:F - 2]

    # conv2 + ReLU, same fused-matmul trick (taps never cross a sample period).
    t2 = jnp.concatenate([h1[:, 0:F - 4], h1[:, 1:F - 3], h1[:, 2:F - 2]], axis=0)
    h2 = jnp.maximum(
        jnp.dot(w2_ref[...], t2, preferred_element_type=jnp.float32) + b2_ref[...],
        0.0)                                                     # (C2, F-4)
    # Zero per-sample padding columns so stats and pass 2 see exact zeros.
    h2 = h2 * mask_ref[:, 1:F - 3]

    h_ref[:, 0:F - 4] = h2
    h_ref[:, F - 4:F] = jnp.zeros((h2.shape[0], 4), jnp.float32)

    # Per-block partial stats as grid-indexed outputs (no cross-step accumulation,
    # so the grid axis stays "parallel" / megacore-friendly).  Sums run on the MXU.
    ones_col = jnp.ones((F - 4, 1), jnp.float32)
    sum_ref[...] = jnp.dot(h2, ones_col, preferred_element_type=jnp.float32)
    sq_ref[...] = jnp.dot(h2 * h2, ones_col, preferred_element_type=jnp.float32)


def _bn_pool_kernel(h_ref, scale_ref, shift_ref, skip_ref, next_ref):
    """skip = h*scale + shift ; next = MaxPool1d(2) via even/odd strided max."""
    F = h_ref.shape[1]
    skip_ref[...] = h_ref[...] * scale_ref[...] + shift_ref[...]   # fused BN FMA
    # Even/odd deinterleave straight from the just-written VMEM block, then max.
    even = skip_ref[:, pl.ds(0, F // 2, stride=2)]
    odd = skip_ref[:, pl.ds(1, F // 2, stride=2)]
    next_ref[...] = jnp.maximum(even, odd)


def encoder_miniblock(x_ncl, w1, b1, w2, b2, gamma, beta, nb=8):
    """x_ncl: (N, Cin, L); weights in PyTorch layout (Cout, Cin, K=3).

    nb = samples per grid step.  For real workloads pick nb so that nb*(L+4) is at
    least ~512 lanes (and budget ~2*nb*(Cin + 2.5*C2)*(L+4)*4 bytes of VMEM).
    """
    N, Cin, L = x_ncl.shape
    assert L % 2 == 0, "MaxPool1d(2): this kernel expects even L (PyTorch floors odd L)"
    C1 = w1.shape[0]
    C2 = w2.shape[0]
    assert w1.shape[2] == 3 and w2.shape[2] == 3

    # batch-block size: largest divisor of N that is <= nb
    nb = max(1, min(nb, N))
    while N % nb:
        nb -= 1
    nblk = N // nb
    P = L + 4                      # per-sample period (2-column halo each side)
    F = nb * P                     # lane width of one block
    f32 = jnp.float32

    # channel-major layout, batch*length on the lane axis, per-sample zero halos
    xcm = jnp.transpose(x_ncl.astype(f32), (1, 0, 2))              # (Cin, N, L)
    xp = jnp.pad(xcm, ((0, 0), (0, 0), (2, 2)))                    # (Cin, N, P)
    xb = xp.reshape(Cin, nblk, nb, P).transpose(1, 0, 2, 3).reshape(nblk, Cin, F)

    # fused tap-major weights: column t = k*Cin + ci
    w1m = jnp.transpose(w1, (0, 2, 1)).reshape(C1, 3 * Cin).astype(f32)
    w2m = jnp.transpose(w2, (0, 2, 1)).reshape(C2, 3 * C1).astype(f32)
    b1c = b1.reshape(C1, 1).astype(f32)
    b2c = b2.reshape(C2, 1).astype(f32)

    # per-period 0/1 mask: 1 exactly at q in [1, L] (conv2's valid h1 columns)
    q = jnp.arange(P)
    mask = jnp.tile(((q >= 1) & (q <= L)).astype(f32), nb).reshape(1, F)

    def const(shape):
        return pl.BlockSpec(shape, lambda i, _n=len(shape): (0,) * _n)

    params = pltpu.CompilerParams(dimension_semantics=("parallel",),
                                  vmem_limit_bytes=VMEM_LIMIT)

    # ---- pass 1: conv1+relu+conv2+relu, per-block partial sum / sumsq ----------
    hb, psum, psq = pl.pallas_call(
        _conv_stats_kernel,
        grid=(nblk,),
        in_specs=[
            pl.BlockSpec((None, Cin, F), lambda i: (i, 0, 0)),
            const((1, F)),
            const((C1, 3 * Cin)),
            const((C1, 1)),
            const((C2, 3 * C1)),
            const((C2, 1)),
        ],
        out_specs=(
            pl.BlockSpec((None, C2, F), lambda i: (i, 0, 0)),
            pl.BlockSpec((None, C2, 1), lambda i: (i, 0, 0)),
            pl.BlockSpec((None, C2, 1), lambda i: (i, 0, 0)),
        ),
        out_shape=(
            jax.ShapeDtypeStruct((nblk, C2, F), f32),
            jax.ShapeDtypeStruct((nblk, C2, 1), f32),
            jax.ShapeDtypeStruct((nblk, C2, 1), f32),
        ),
        compiler_params=params,
    )(xb, mask, w1m, b1c, w2m, b2c)

    # ---- finalize BatchNorm training-mode stats (tiny per-channel math, XLA) ---
    cnt = float(N * L)
    mean = jnp.sum(psum, axis=0) / cnt                             # (C2, 1)
    var = jnp.sum(psq, axis=0) / cnt - mean * mean                 # biased var
    # TODO(synk): E[h^2]-mean^2 can cancel in f32 at very large N*L with large
    # activation means; a centered second pass would be safer in that regime.
    scale = gamma.reshape(C2, 1).astype(f32) * lax.rsqrt(var + EPS)
    shift = beta.reshape(C2, 1).astype(f32) - mean * scale

    # ---- pass 2: BN FMA + MaxPool1d(2); h aliased into skip ---------------------
    skipb, nextb = pl.pallas_call(
        _bn_pool_kernel,
        grid=(nblk,),
        in_specs=[
            pl.BlockSpec((None, C2, F), lambda i: (i, 0, 0)),
            const((C2, 1)),
            const((C2, 1)),
        ],
        out_specs=(
            pl.BlockSpec((None, C2, F), lambda i: (i, 0, 0)),
            pl.BlockSpec((None, C2, F // 2), lambda i: (i, 0, 0)),
        ),
        out_shape=(
            jax.ShapeDtypeStruct((nblk, C2, F), f32),
            jax.ShapeDtypeStruct((nblk, C2, F // 2), f32),
        ),
        input_output_aliases={0: 0},        # h2 buffer reused for skip
        compiler_params=params,
    )(hb, scale, shift)

    # strip the per-sample padding columns and return PyTorch NCL layout
    skip = skipb.reshape(nblk, C2, nb, P)[:, :, :, :L]
    skip = skip.transpose(0, 2, 1, 3).reshape(N, C2, L)
    nxt = nextb.reshape(nblk, C2, nb, P // 2)[:, :, :, :L // 2]
    nxt = nxt.transpose(0, 2, 1, 3).reshape(N, C2, L // 2)
    return nxt, skip


def _reference(x_ncl, w1, b1, w2, b2, gamma, beta):
    """Pure-JAX reference matching the PyTorch forward (BN in training mode)."""
    def conv(x, w, b):
        y = lax.conv_general_dilated(x, w, window_strides=(1,), padding="SAME",
                                     dimension_numbers=("NCH", "OIH", "NCH"))
        return y + b[None, :, None]

    h = jnp.maximum(conv(x_ncl, w1, b1), 0.0)
    h = jnp.maximum(conv(h, w2, b2), 0.0)
    mean = jnp.mean(h, axis=(0, 2), keepdims=True)
    var = jnp.mean((h - mean) ** 2, axis=(0, 2), keepdims=True)
    skip = (h - mean) / jnp.sqrt(var + EPS) * gamma[None, :, None] + beta[None, :, None]
    N, C, L = skip.shape
    nxt = jnp.max(skip.reshape(N, C, L // 2, 2), axis=-1)
    return nxt, skip


if __name__ == "__main__":
    key = jax.random.PRNGKey(0)
    N, Cin, L = 4, 4, 16
    K = 3
    C1 = Cin * 2
    C2 = Cin * 2

    k1, k2, k3, k4, k5 = jax.random.split(key, 5)
    x = jax.random.normal(k1, (N, Cin, L), dtype=jnp.float32)
    w1 = jax.random.normal(k2, (C1, Cin, K), dtype=jnp.float32) * 0.2
    b1 = jax.random.normal(k3, (C1,), dtype=jnp.float32) * 0.1
    w2 = jax.random.normal(k4, (C2, C1, K), dtype=jnp.float32) * 0.2
    b2 = jax.random.normal(k5, (C2,), dtype=jnp.float32) * 0.1
    gamma = jnp.ones((C2,), dtype=jnp.float32)   # nn.BatchNorm1d default affine init
    beta = jnp.zeros((C2,), dtype=jnp.float32)

    # nb=2 exercises the multi-block grid and the cross-block stats reduction
    next_layer, skip_connection = encoder_miniblock(x, w1, b1, w2, b2, gamma, beta, nb=2)
    jax.block_until_ready((next_layer, skip_connection))

    ref_next, ref_skip = _reference(x, w1, b1, w2, b2, gamma, beta)
    assert next_layer.shape == (N, C2, L // 2)
    assert skip_connection.shape == (N, C2, L)
    assert jnp.allclose(skip_connection, ref_skip, atol=1e-4, rtol=1e-4)
    assert jnp.allclose(next_layer, ref_next, atol=1e-4, rtol=1e-4)

    print("KERNEL_OK")
</pallas_src>

<mosaic_0001>
module attributes {stable_mosaic.version = 11 : i64} {
  func.func @_conv_stats_kernel(%arg0: i32, %arg1: memref<1x4x40xf32, #tpu.memory_space<vmem>>, %arg2: memref<1x40xf32, #tpu.memory_space<vmem>>, %arg3: memref<8x12xf32, #tpu.memory_space<vmem>>, %arg4: memref<8x1xf32, #tpu.memory_space<vmem>>, %arg5: memref<8x24xf32, #tpu.memory_space<vmem>>, %arg6: memref<8x1xf32, #tpu.memory_space<vmem>>, %arg7: memref<1x8x40xf32, #tpu.memory_space<vmem>>, %arg8: memref<1x8x1xf32, #tpu.memory_space<vmem>>, %arg9: memref<1x8x1xf32, #tpu.memory_space<vmem>>) attributes {dimension_semantics = [#tpu.dimension_semantics<parallel>], iteration_bounds = array<i64: 2>, scalar_prefetch = 0 : i64, scratch_operands = 0 : i64, tpu.core_type = #tpu.core_type<tc>, window_params = [{transform_indices = @transform_0, window_bounds = array<i64: 1, 4, 40>}, {pipeline_mode = #tpu.pipeline_mode<synchronous>, transform_indices = @transform_1, window_bounds = array<i64: 1, 40>}, {pipeline_mode = #tpu.pipeline_mode<synchronous>, transform_indices = @transform_2, window_bounds = array<i64: 8, 12>}, {pipeline_mode = #tpu.pipeline_mode<synchronous>, transform_indices = @transform_3, window_bounds = array<i64: 8, 1>}, {pipeline_mode = #tpu.pipeline_mode<synchronous>, transform_indices = @transform_4, window_bounds = array<i64: 8, 24>}, {pipeline_mode = #tpu.pipeline_mode<synchronous>, transform_indices = @transform_5, window_bounds = array<i64: 8, 1>}, {transform_indices = @transform_6, window_bounds = array<i64: 1, 8, 40>}, {transform_indices = @transform_7, window_bounds = array<i64: 1, 8, 1>}, {transform_indices = @transform_8, window_bounds = array<i64: 1, 8, 1>}]} {
    %c0 = arith.constant 0 : index
    %c0_0 = arith.constant 0 : index
    %c0_1 = arith.constant 0 : index
    %0 = vector.load %arg1[%c0, %c0_0, %c0_1] : memref<1x4x40xf32, #tpu.memory_space<vmem>>, vector<1x4x40xf32>
    %1 = vector.shape_cast %0 : vector<1x4x40xf32> to vector<4x40xf32>
    %2 = vector.extract_strided_slice %1 {offsets = [0, 0], sizes = [4, 38], strides = [1, 1]} : vector<4x40xf32> to vector<4x38xf32>
    %3 = vector.extract_strided_slice %1 {offsets = [0, 1], sizes = [4, 38], strides = [1, 1]} : vector<4x40xf32> to vector<4x38xf32>
    %4 = vector.extract_strided_slice %1 {offsets = [0, 2], sizes = [4, 38], strides = [1, 1]} : vector<4x40xf32> to vector<4x38xf32>
    %5 = tpu.concatenate %2, %3, %4 in 0 : vector<4x38xf32>, vector<4x38xf32>, vector<4x38xf32> -> vector<12x38xf32>
    %c0_2 = arith.constant 0 : index
    %c0_3 = arith.constant 0 : index
    %6 = vector.load %arg3[%c0_2, %c0_3] : memref<8x12xf32, #tpu.memory_space<vmem>>, vector<8x12xf32>
    %cst = arith.constant dense<0.000000e+00> : vector<8x38xf32>
    %7 = tpu.matmul %6, %5, %cst {dimension_numbers = #tpu.dot_dimension_numbers<[1], [0], [0], [1], [0, 0, 1, 1], [], []>} : vector<8x12xf32>, vector<12x38xf32>, vector<8x38xf32> -> vector<8x38xf32>
    %c0_4 = arith.constant 0 : index
    %c0_5 = arith.constant 0 : index
    %8 = vector.load %arg4[%c0_4, %c0_5] : memref<8x1xf32, #tpu.memory_space<vmem>>, vector<8x1xf32>
    %9 = vector.broadcast %8 : vector<8x1xf32> to vector<8x38xf32>
    %10 = arith.addf %7, %9 : vector<8x38xf32>
    %cst_6 = arith.constant 0.000000e+00 : f32
    %11 = vector.broadcast %cst_6 : f32 to vector<8x38xf32>
    %12 = arith.maximumf %10, %11 : vector<8x38xf32>
    %c0_7 = arith.constant 0 : index
    %c0_8 = arith.constant 0 : index
    %13 = vector.load %arg2[%c0_7, %c0_8] : memref<1x40xf32, #tpu.memory_space<vmem>>, vector<1x38xf32>
    %14 = vector.broadcast %13 : vector<1x38xf32> to vector<8x38xf32>
    %15 = arith.mulf %12, %14 : vector<8x38xf32>
    %16 = vector.extract_strided_slice %15 {offsets = [0, 0], sizes = [8, 36], strides = [1, 1]} : vector<8x38xf32> to vector<8x36xf32>
    %17 = vector.extract_strided_slice %15 {offsets = [0, 1], sizes = [8, 36], strides = [1, 1]} : vector<8x38xf32> to vector<8x36xf32>
    %18 = vector.extract_strided_slice %15 {offsets = [0, 2], sizes = [8, 36], strides = [1, 1]} : vector<8x38xf32> to vector<8x36xf32>
    %19 = tpu.concatenate %16, %17, %18 in 0 : vector<8x36xf32>, vector<8x36xf32>, vector<8x36xf32> -> vector<24x36xf32>
    %c0_9 = arith.constant 0 : index
    %c0_10 = arith.constant 0 : index
    %20 = vector.load %arg5[%c0_9, %c0_10] : memref<8x24xf32, #tpu.memory_space<vmem>>, vector<8x24xf32>
    %cst_11 = arith.constant dense<0.000000e+00> : vector<8x36xf32>
    %21 = tpu.matmul %20, %19, %cst_11 {dimension_numbers = #tpu.dot_dimension_numbers<[1], [0], [0], [1], [0, 0, 1, 1], [], []>} : vector<8x24xf32>, vector<24x36xf32>, vector<8x36xf32> -> vector<8x36xf32>
    %c0_12 = arith.constant 0 : index
    %c0_13 = arith.constant 0 : index
    %22 = vector.load %arg6[%c0_12, %c0_13] : memref<8x1xf32, #tpu.memory_space<vmem>>, vector<8x1xf32>
    %23 = vector.broadcast %22 : vector<8x1xf32> to vector<8x36xf32>
    %24 = arith.addf %21, %23 : vector<8x36xf32>
    %cst_14 = arith.constant 0.000000e+00 : f32
    %25 = vector.broadcast %cst_14 : f32 to vector<8x36xf32>
    %26 = arith.maximumf %24, %25 : vector<8x36xf32>
    %c0_15 = arith.constant 0 : index
    %c1 = arith.constant 1 : index
    %27 = vector.load %arg2[%c0_15, %c1] : memref<1x40xf32, #tpu.memory_space<vmem>>, vector<1x36xf32>
    %28 = vector.broadcast %27 : vector<1x36xf32> to vector<8x36xf32>
    %29 = arith.mulf %26, %28 : vector<8x36xf32>
    %c0_16 = arith.constant 0 : index
    %c0_17 = arith.constant 0 : index
    %c0_18 = arith.constant 0 : index
    %30 = vector.load %arg7[%c0_16, %c0_17, %c0_18] : memref<1x8x40xf32, #tpu.memory_space<vmem>>, vector<1x8x36xf32>
    %31 = vector.shape_cast %30 : vector<1x8x36xf32> to vector<8x36xf32>
    %32 = vector.shape_cast %29 : vector<8x36xf32> to vector<1x8x36xf32>
    tpu.vector_store %arg7[%c0_16, %c0_17, %c0_18], %32 {strides = array<i32>} : memref<1x8x40xf32, #tpu.memory_space<vmem>>, vector<1x8x36xf32>,
    %cst_19 = arith.constant 0.000000e+00 : f32
    %33 = vector.broadcast %cst_19 : f32 to vector<8x4xf32>
    %c0_20 = arith.constant 0 : index
    %c0_21 = arith.constant 0 : index
    %c36 = arith.constant 36 : index
    %34 = vector.load %arg7[%c0_20, %c0_21, %c36] : memref<1x8x40xf32, #tpu.memory_space<vmem>>, vector<1x8x4xf32>
    %35 = vector.shape_cast %34 : vector<1x8x4xf32> to vector<8x4xf32>
    %36 = vector.shape_cast %33 : vector<8x4xf32> to vector<1x8x4xf32>
    tpu.vector_store %arg7[%c0_20, %c0_21, %c36], %36 {strides = array<i32>} : memref<1x8x40xf32, #tpu.memory_space<vmem>>, vector<1x8x4xf32>,
    %cst_22 = arith.constant 1.000000e+00 : f32
    %37 = vector.broadcast %cst_22 : f32 to vector<36x1xf32>
    %cst_23 = arith.constant dense<0.000000e+00> : vector<8x1xf32>
    %38 = tpu.matmul %29, %37, %cst_23 {dimension_numbers = #tpu.dot_dimension_numbers<[1], [0], [0], [1], [0, 0, 1, 1], [], []>} : vector<8x36xf32>, vector<36x1xf32>, vector<8x1xf32> -> vector<8x1xf32>
    %c0_24 = arith.constant 0 : index
    %c0_25 = arith.constant 0 : index
    %c0_26 = arith.constant 0 : index
    %39 = vector.load %arg8[%c0_24, %c0_25, %c0_26] : memref<1x8x1xf32, #tpu.memory_space<vmem>>, vector<1x8x1xf32>
    %40 = vector.shape_cast %39 : vector<1x8x1xf32> to vector<8x1xf32>
    %41 = vector.shape_cast %38 : vector<8x1xf32> to vector<1x8x1xf32>
    tpu.vector_store %arg8[%c0_24, %c0_25, %c0_26], %41 {strides = array<i32>} : memref<1x8x1xf32, #tpu.memory_space<vmem>>, vector<1x8x1xf32>,
    %42 = arith.mulf %29, %29 : vector<8x36xf32>
    %cst_27 = arith.constant dense<0.000000e+00> : vector<8x1xf32>
    %43 = tpu.matmul %42, %37, %cst_27 {dimension_numbers = #tpu.dot_dimension_numbers<[1], [0], [0], [1], [0, 0, 1, 1], [], []>} : vector<8x36xf32>, vector<36x1xf32>, vector<8x1xf32> -> vector<8x1xf32>
    %c0_28 = arith.constant 0 : index
    %c0_29 = arith.constant 0 : index
    %c0_30 = arith.constant 0 : index
    %44 = vector.load %arg9[%c0_28, %c0_29, %c0_30] : memref<1x8x1xf32, #tpu.memory_space<vmem>>, vector<1x8x1xf32>
    %45 = vector.shape_cast %44 : vector<1x8x1xf32> to vector<8x1xf32>
    %46 = vector.shape_cast %43 : vector<8x1xf32> to vector<1x8x1xf32>
    tpu.vector_store %arg9[%c0_28, %c0_29, %c0_30], %46 {strides = array<i32>} : memref<1x8x1xf32, #tpu.memory_space<vmem>>, vector<1x8x1xf32>,
    return
  }
  func.func @transform_0(%arg0: i32) -> (i32, i32, i32) {
    %c0_i32 = arith.constant 0 : i32
    %c0_i32_0 = arith.constant 0 : i32
    %c0_i32_1 = arith.constant 0 : i32
    return %arg0, %c0_i32, %c0_i32_0 : i32, i32, i32
  }
  func.func @transform_1(%arg0: i32) -> (i32, i32) {
    %c0_i32 = arith.constant 0 : i32
    %c0_i32_0 = arith.constant 0 : i32
    %c0_i32_1 = arith.constant 0 : i32
    return %c0_i32, %c0_i32_0 : i32, i32
  }
  func.func @transform_2(%arg0: i32) -> (i32, i32) {
    %c0_i32 = arith.constant 0 : i32
    %c0_i32_0 = arith.constant 0 : i32
    %c0_i32_1 = arith.constant 0 : i32
    return %c0_i32, %c0_i32_0 : i32, i32
  }
  func.func @transform_3(%arg0: i32) -> (i32, i32) {
    %c0_i32 = arith.constant 0 : i32
    %c0_i32_0 = arith.constant 0 : i32
    %c0_i32_1 = arith.constant 0 : i32
    return %c0_i32, %c0_i32_0 : i32, i32
  }
  func.func @transform_4(%arg0: i32) -> (i32, i32) {
    %c0_i32 = arith.constant 0 : i32
    %c0_i32_0 = arith.constant 0 : i32
    %c0_i32_1 = arith.constant 0 : i32
    return %c0_i32, %c0_i32_0 : i32, i32
  }
  func.func @transform_5(%arg0: i32) -> (i32, i32) {
    %c0_i32 = arith.constant 0 : i32
    %c0_i32_0 = arith.constant 0 : i32
    %c0_i32_1 = arith.constant 0 : i32
    return %c0_i32, %c0_i32_0 : i32, i32
  }
  func.func @transform_6(%arg0: i32) -> (i32, i32, i32) {
    %c0_i32 = arith.constant 0 : i32
    %c0_i32_0 = arith.constant 0 : i32
    %c0_i32_1 = arith.constant 0 : i32
    return %arg0, %c0_i32, %c0_i32_0 : i32, i32, i32
  }
  func.func @transform_7(%arg0: i32) -> (i32, i32, i32) {
    %c0_i32 = arith.constant 0 : i32
    %c0_i32_0 = arith.constant 0 : i32
    %c0_i32_1 = arith.constant 0 : i32
    return %arg0, %c0_i32, %c0_i32_0 : i32, i32, i32
  }
  func.func @transform_8(%arg0: i32) -> (i32, i32, i32) {
    %c0_i32 = arith.constant 0 : i32
    %c0_i32_0 = arith.constant 0 : i32
    %c0_i32_1 = arith.constant 0 : i32
    return %arg0, %c0_i32, %c0_i32_0 : i32, i32, i32
  }
}

</mosaic_0001>

<llo_original>
// kernel: tpu_custom_call.1
$region0: #{tpu_custom_call.1}
  #allocation0 [shape = 'u32[]', space=smem, size = 0x4, offset = 0x4, fixed_abs, tag = 'smem constant byte address 0x4 - core index']
  #allocation1 [shape = 'u32[144,128]{1,0:T(1,128)}', space=vmem, size = 0x12000, scoped, tag = 'internal scratch']
  %s0 = inlined_call_operand.vmem [shape: f32[2,4,40], index: 0, kind: input, shape index: {}]
  %s1 = inlined_call_operand.hbm [shape: f32[1,40], index: 1, kind: input, shape index: {}]
  %s2 = inlined_call_operand.vmem [shape: f32[8,12], index: 2, kind: input, shape index: {}]
  %s3 = inlined_call_operand.vmem [shape: f32[8,1], index: 3, kind: input, shape index: {}]
  %s4 = inlined_call_operand.vmem [shape: f32[8,24], index: 4, kind: input, shape index: {}]
  %s5 = inlined_call_operand.vmem [shape: f32[8,1], index: 5, kind: input, shape index: {}]
  %s6 = inlined_call_operand.hbm [shape: f32[2,8,40], index: 6, kind: output, shape index: {0}]
  %s7 = inlined_call_operand.vmem [shape: f32[2,8,1], index: 7, kind: output, shape index: {1}]
  %s8 = inlined_call_operand.vmem [shape: f32[2,8,1], index: 8, kind: output, shape index: {2}]
  %9 = xla_tuple %s6, %s7, %s8
  %s10 = sld [smem:[#allocation0]]
  $region77: #{tpu_custom_call.1} parent=0
    _
  %s12 = ssub.s32 1, %s10
  %s13 = scalar_select 0, %s12, %s10
  $region1: #{tpu_custom_call.1} parent=0
    #allocation2 [shape = 'u8[512]{0}', space=vmem, size = 0x400, scoped, tag = 'input window, operand 1, single buffered']
    #allocation3 [shape = 's32[2]{0}', space=sflag, size = 0x8, scoped, tag = 'scoped memory for tpu_custom_call.1']
    #allocation4 [shape = 's32[2]{0}', space=sflag, size = 0x8, scoped, tag = 'scoped memory for tpu_custom_call.1']
    #allocation5 [shape = 'u8[8192]{0}', space=vmem, size = 0x2000, scoped, tag = 'output window, operand 0']
    %14 = vsyncpa [#allocation3], 0
    %15 = vsyncpa [#allocation4], 0
    %s16 = scalar_lea.sflag [#allocation4], 1
    %17 = vsyncpa %s16, 0
    loop: start=0, step=1, limit=4
    $region2: #{tpu_custom_call.1} parent=1 // loop_pre_header
      _
    $region3: #{tpu_custom_call.1} parent=1 // loop_header
      %s19 = sphi 0, %s23
      %p20 = scmp.ge.s32.totalorder %s19, 4
      %s29 = sphi 0, %s31
      %s32 = sphi 0, %s29
      %s33 = sphi 0, %s32
      %s49 = sphi 0, %s33
      %s53 = sphi 0, %s53
      %s55 = sphi 0, %s53
      %s56 = sphi 0, %s55
      %s70 = sphi 0, %s56
      %s74 = sphi 0, %s74
      %s76 = sphi 0, %s74
      %s77 = sphi 0, %s76
      %s91 = sphi 0, %s77
      %s95 = sphi 0, %s95
      %s97 = sphi 0, %s95
      %s98 = sphi 0, %s97
      %s112 = sphi 0, %s98
      %s116 = sphi 0, %s116
      %s118 = sphi 0, %s116
      %s119 = sphi 0, %s118
      %s133 = sphi 0, %s119
      %s137 = sphi 0, %s137
      %s139 = sphi 0, %s137
      %s140 = sphi 0, %s139
      %s154 = sphi 0, %s140
      %s160 = sphi 0, %s162
      %s163 = sphi 0, %s160
      %s164 = sphi 0, %s163
      %s180 = sphi 0, %s164
      %s186 = sphi 0, %s188
      %s189 = sphi 0, %s186
      %s190 = sphi 0, %s189
      %s206 = sphi 0, %s190
      %s212 = sphi 0, %s214
      %s215 = sphi 0, %s212
      %s216 = sphi 0, %s215
      %s232 = sphi 0, %s216
    $region4: #{tpu_custom_call.1} parent=1 // loop_header_branch
      %22 = sbr.rel (%p20) target = $region8
    $region5: #{tpu_custom_call.1} parent=1 // loop_body
      %s24 = ssub.s32 %s19, 1
      %s25 = ssub.s32 %s19, 2
      %s26 = sadd.s32 %s19, 1
      %s27 = ssub.s32 %s19, %s26
      %p28 = scmp.eq.s32.totalorder %s27, 0
      %s30 = sadd.s32 %s29, 1
      %s31 = scalar_select %p28, %s29, %s30
      %p34 = pneg %p28
      %p35 = scmp.eq.s32.totalorder %s19, 1
      %p36 = por %p34, %p35
      %p37 = scmp.ne.s32.totalorder %s29, %s32
      %p38 = scmp.eq.s32.totalorder %s19, 0
      %p39 = por %p37, %p38
      %p40 = scmp.ne.s32.totalorder %s29, %s32
      %p41 = scmp.eq.s32.totalorder %s24, 1
      %p42 = por %p40, %p41
      %p43 = scmp.ne.s32.totalorder %s32, %s33
      %p44 = scmp.eq.s32.totalorder %s24, 0
      %p45 = por %p43, %p44
      %p46 = scmp.ne.s32.totalorder %s32, %s33
      %p47 = scmp.eq.s32.totalorder %s25, 1
      %p48 = por %p46, %p47
      %p50 = scmp.ne.s32.totalorder %s33, %s49
      %p51 = scmp.eq.s32.totalorder %s25, 0
      %p52 = por %p50, %p51
      %s54 = sadd.s32 %s53, 1
      %p57 = scmp.eq.s32.totalorder %s19, 1
      %p58 = scmp.ne.s32.totalorder %s53, %s55
      %p59 = scmp.eq.s32.totalorder %s19, 0
      %p60 = por %p58, %p59
      %p61 = scmp.ne.s32.totalorder %s53, %s55
      %p62 = scmp.eq.s32.totalorder %s24, 1
      %p63 = por %p61, %p62
      %p64 = scmp.ne.s32.totalorder %s55, %s56
      %p65 = scmp.eq.s32.totalorder %s24, 0
      %p66 = por %p64, %p65
      %p67 = scmp.ne.s32.totalorder %s55, %s56
      %p68 = scmp.eq.s32.totalorder %s25, 1
      %p69 = por %p67, %p68
      %p71 = scmp.ne.s32.totalorder %s56, %s70
      %p72 = scmp.eq.s32.totalorder %s25, 0
      %p73 = por %p71, %p72
      %s75 = sadd.s32 %s74, 1
      %p78 = scmp.eq.s32.totalorder %s19, 1
      %p79 = scmp.ne.s32.totalorder %s74, %s76
      %p80 = scmp.eq.s32.totalorder %s19, 0
      %p81 = por %p79, %p80
      %p82 = scmp.ne.s32.totalorder %s74, %s76
      %p83 = scmp.eq.s32.totalorder %s24, 1
      %p84 = por %p82, %p83
      %p85 = scmp.ne.s32.totalorder %s76, %s77
      %p86 = scmp.eq.s32.totalorder %s24, 0
      %p87 = por %p85, %p86
      %p88 = scmp.ne.s32.totalorder %s76, %s77
      %p89 = scmp.eq.s32.totalorder %s25, 1
      %p90 = por %p88, %p89
      %p92 = scmp.ne.s32.totalorder %s77, %s91
      %p93 = scmp.eq.s32.totalorder %s25, 0
      %p94 = por %p92, %p93
      %s96 = sadd.s32 %s95, 1
      %p99 = scmp.eq.s32.totalorder %s19, 1
      %p100 = scmp.ne.s32.totalorder %s95, %s97
      %p101 = scmp.eq.s32.totalorder %s19, 0
      %p102 = por %p100, %p101
      %p103 = scmp.ne.s32.totalorder %s95, %s97
      %p104 = scmp.eq.s32.totalorder %s24, 1
      %p105 = por %p103, %p104
      %p106 = scmp.ne.s32.totalorder %s97, %s98
      %p107 = scmp.eq.s32.totalorder %s24, 0
      %p108 = por %p106, %p107
      %p109 = scmp.ne.s32.totalorder %s97, %s98
      %p110 = scmp.eq.s32.totalorder %s25, 1
      %p111 = por %p109, %p110
      %p113 = scmp.ne.s32.totalorder %s98, %s112
      %p114 = scmp.eq.s32.totalorder %s25, 0
      %p115 = por %p113, %p114
      %s117 = sadd.s32 %s116, 1
      %p120 = scmp.eq.s32.totalorder %s19, 1
      %p121 = scmp.ne.s32.totalorder %s116, %s118
      %p122 = scmp.eq.s32.totalorder %s19, 0
      %p123 = por %p121, %p122
      %p124 = scmp.ne.s32.totalorder %s116, %s118
      %p125 = scmp.eq.s32.totalorder %s24, 1
      %p126 = por %p124, %p125
      %p127 = scmp.ne.s32.totalorder %s118, %s119
      %p128 = scmp.eq.s32.totalorder %s24, 0
      %p129 = por %p127, %p128
      %p130 = scmp.ne.s32.totalorder %s118, %s119
      %p131 = scmp.eq.s32.totalorder %s25, 1
      %p132 = por %p130, %p131
      %p134 = scmp.ne.s32.totalorder %s119, %s133
      %p135 = scmp.eq.s32.totalorder %s25, 0
      %p136 = por %p134, %p135
      %s138 = sadd.s32 %s137, 1
      %p141 = scmp.eq.s32.totalorder %s19, 1
      %p142 = scmp.ne.s32.totalorder %s137, %s139
      %p143 = scmp.eq.s32.totalorder %s19, 0
      %p144 = por %p142, %p143
      %p145 = scmp.ne.s32.totalorder %s137, %s139
      %p146 = scmp.eq.s32.totalorder %s24, 1
      %p147 = por %p145, %p146
      %p148 = scmp.ne.s32.totalorder %s139, %s140
      %p149 = scmp.eq.s32.totalorder %s24, 0
      %p150 = por %p148, %p149
      %p151 = scmp.ne.s32.totalorder %s139, %s140
      %p152 = scmp.eq.s32.totalorder %s25, 1
      %p153 = por %p151, %p152
      %p155 = scmp.ne.s32.totalorder %s140, %s154
      %p156 = scmp.eq.s32.totalorder %s25, 0
      %p157 = por %p155, %p156
      %s158 = ssub.s32 %s19, %s26
      %p159 = scmp.eq.s32.totalorder %s158, 0
      %s161 = sadd.s32 %s160, 1
      %s162 = scalar_select %p159, %s160, %s161
      %p165 = pneg %p159
      %p166 = scmp.eq.s32.totalorder %s19, 1
      %p167 = por %p165, %p166
      %p168 = scmp.ne.s32.totalorder %s160, %s163
      %p169 = scmp.eq.s32.totalorder %s19, 0
      %p170 = por %p168, %p169
      %p171 = scmp.ne.s32.totalorder %s160, %s163
      %p172 = scmp.eq.s32.totalorder %s24, 1
      %p173 = por %p171, %p172
      %p174 = scmp.ne.s32.totalorder %s163, %s164
      %p175 = scmp.eq.s32.totalorder %s24, 0
      %p176 = por %p174, %p175
      %p177 = scmp.ne.s32.totalorder %s163, %s164
      %p178 = scmp.eq.s32.totalorder %s25, 1
      %p179 = por %p177, %p178
      %p181 = scmp.ne.s32.totalorder %s164, %s180
      %p182 = scmp.eq.s32.totalorder %s25, 0
      %p183 = por %p181, %p182
      %s184 = ssub.s32 %s19, %s26
      %p185 = scmp.eq.s32.totalorder %s184, 0
      %s187 = sadd.s32 %s186, 1
      %s188 = scalar_select %p185, %s186, %s187
      %p191 = pneg %p185
      %p192 = scmp.eq.s32.totalorder %s19, 1
      %p193 = por %p191, %p192
      %p194 = scmp.ne.s32.totalorder %s186, %s189
      %p195 = scmp.eq.s32.totalorder %s19, 0
      %p196 = por %p194, %p195
      %p197 = scmp.ne.s32.totalorder %s186, %s189
      %p198 = scmp.eq.s32.totalorder %s24, 1
      %p199 = por %p197, %p198
      %p200 = scmp.ne.s32.totalorder %s189, %s190
      %p201 = scmp.eq.s32.totalorder %s24, 0
      %p202 = por %p200, %p201
      %p203 = scmp.ne.s32.totalorder %s189, %s190
      %p204 = scmp.eq.s32.totalorder %s25, 1
      %p205 = por %p203, %p204
      %p207 = scmp.ne.s32.totalorder %s190, %s206
      %p208 = scmp.eq.s32.totalorder %s25, 0
      %p209 = por %p207, %p208
      %s210 = ssub.s32 %s19, %s26
      %p211 = scmp.eq.s32.totalorder %s210, 0
      %s213 = sadd.s32 %s212, 1
      %s214 = scalar_select %p211, %s212, %s213
      %p217 = pneg %p211
      %p218 = scmp.eq.s32.totalorder %s19, 1
      %p219 = por %p217, %p218
      %p220 = scmp.ne.s32.totalorder %s212, %s215
      %p221 = scmp.eq.s32.totalorder %s19, 0
      %p222 = por %p220, %p221
      %p223 = scmp.ne.s32.totalorder %s212, %s215
      %p224 = scmp.eq.s32.totalorder %s24, 1
      %p225 = por %p223, %p224
      %p226 = scmp.ne.s32.totalorder %s215, %s216
      %p227 = scmp.eq.s32.totalorder %s24, 0
      %p228 = por %p226, %p227
      %p229 = scmp.ne.s32.totalorder %s215, %s216
      %p230 = scmp.eq.s32.totalorder %s25, 1
      %p231 = por %p229, %p230
      %p233 = scmp.ne.s32.totalorder %s216, %s232
      %p234 = scmp.eq.s32.totalorder %s25, 0
      %p235 = por %p233, %p234
      %p236 = scmp.le.s32.totalorder 1, %s19
      %p237 = scmp.lt.s32.totalorder %s19, 3
      %p238 = pnand %p236, %p237
      %p239 = pneg %p238
      // Predicated region
      $region9: #{tpu_custom_call.1} parent=5 // pred_check
        _
      $region10: #{tpu_custom_call.1} parent=5 // pred_check_branch
        %241 = sbr.rel (%p238) target = $region12
      $region11: #{tpu_custom_call.1} parent=5 // pred_region
        %s242 = ssub.s32 %s19, 1
        // Predicated region
        $region13: #{tpu_custom_call.1} parent=11 // pred_check
          %p243 = pneg %p66
        $region14: #{tpu_custom_call.1} parent=11 // pred_check_branch
          %245 = sbr.rel (%p243) target = $region16
        $region15: #{tpu_custom_call.1} parent=11 // pred_region
          %s247 = ssub.s32 16, 16
          %248 = vsyncadd [#allocation3], %s247
          %s250 = sshll.u32 [#allocation2], 4
          %s251 = int_to_ptr.vmem [resolvable:$true] %s250
          %253 = dma.hbm_to_vmem [thread:$0]  %s1, 16, %s251, [#allocation3]
        $region16: #{tpu_custom_call.1} parent=11 // pred_fallthru
          _
        // Predicated region
        $region17: #{tpu_custom_call.1} parent=11 // pred_check
          %p254 = pneg %p87
        $region18: #{tpu_custom_call.1} parent=11 // pred_check_branch
          %256 = sbr.rel (%p254) target = $region20
        $region19: #{tpu_custom_call.1} parent=11 // pred_region
          _
        $region20: #{tpu_custom_call.1} parent=11 // pred_fallthru
          _
        // Predicated region
        $region21: #{tpu_custom_call.1} parent=11 // pred_check
          %p257 = pneg %p108
        $region22: #{tpu_custom_call.1} parent=11 // pred_check_branch
          %259 = sbr.rel (%p257) target = $region24
        $region23: #{tpu_custom_call.1} parent=11 // pred_region
          _
        $region24: #{tpu_custom_call.1} parent=11 // pred_fallthru
          _
        // Predicated region
        $region25: #{tpu_custom_call.1} parent=11 // pred_check
          %p260 = pneg %p129
        $region26: #{tpu_custom_call.1} parent=11 // pred_check_branch
          %262 = sbr.rel (%p260) target = $region28
        $region27: #{tpu_custom_call.1} parent=11 // pred_region
          _
        $region28: #{tpu_custom_call.1} parent=11 // pred_fallthru
          _
        // Predicated region
        $region29: #{tpu_custom_call.1} parent=11 // pred_check
          %p263 = pneg %p150
        $region30: #{tpu_custom_call.1} parent=11 // pred_check_branch
          %265 = sbr.rel (%p263) target = $region32
        $region31: #{tpu_custom_call.1} parent=11 // pred_region
          _
        $region32: #{tpu_custom_call.1} parent=11 // pred_fallthru
          _
      $region12: #{tpu_custom_call.1} parent=5 // pred_fallthru
        _
      %p266 = scmp.lt.s32.totalorder %s19, 2
      // Predicated region
      $region33: #{tpu_custom_call.1} parent=5 // pred_check
        %p267 = pneg %p266
      $region34: #{tpu_custom_call.1} parent=5 // pred_check_branch
        %269 = sbr.rel (%p267) target = $region36
      $region35: #{tpu_custom_call.1} parent=5 // pred_region
        // Predicated region
        $region37: #{tpu_custom_call.1} parent=35 // pred_check
          %p270 = pneg %p39
        $region38: #{tpu_custom_call.1} parent=35 // pred_check_branch
          %272 = sbr.rel (%p270) target = $region40
        $region39: #{tpu_custom_call.1} parent=35 // pred_region
          %p273 = scmp.lt.s32.totalorder %s19, 1
          %s274 = scalar_select %p273, %s19, 1
          %s275 = smul.addr %s274, 4
          %s276 = scalar_lea.vmem %s0, %s275
        $region40: #{tpu_custom_call.1} parent=35 // pred_fallthru
          _
      $region36: #{tpu_custom_call.1} parent=5 // pred_fallthru
        _
      %p277 = scmp.le.s32.totalorder 1, %s19
      %p278 = scmp.lt.s32.totalorder %s19, 3
      %p279 = pnand %p277, %p278
      %p280 = pneg %p279
      // Predicated region
      $region41: #{tpu_custom_call.1} parent=5 // pred_check
        _
      $region42: #{tpu_custom_call.1} parent=5 // pred_check_branch
        %282 = sbr.rel (%p279) target = $region44
      $region43: #{tpu_custom_call.1} parent=5 // pred_region
        %s283 = ssub.s32 %s19, 1
        // Predicated region
        $region45: #{tpu_custom_call.1} parent=43 // pred_check
          %p284 = pneg %p66
        $region46: #{tpu_custom_call.1} parent=43 // pred_check_branch
          %286 = sbr.rel (%p284) target = $region48
        $region47: #{tpu_custom_call.1} parent=43 // pred_region
          %287 = dma.done [#allocation3], 16
        $region48: #{tpu_custom_call.1} parent=43 // pred_fallthru
          _
        %p288 = scmp.lt.s32.totalorder %s24, 1
        %s289 = scalar_select %p288, %s24, 1
        %s290 = smul.addr %s289, 4
        %s291 = scalar_lea.vmem %s0, %s290
        %p292 = pneg %p45
        %p293 = pneg %p42
        %p294 = pneg %p66
        %p295 = pneg %p63
        %p296 = pneg %p87
        %p297 = pneg %p84
        %p298 = pneg %p108
        %p299 = pneg %p105
        %p300 = pneg %p129
        %p301 = pneg %p126
        %p302 = pneg %p150
        %p303 = pneg %p147
        %p304 = pneg %p176
        %p305 = pneg %p173
        %s306 = sand.u32 %s163, 1
        %s307 = scalar_lea.sflag [#allocation4], %s306
        %s308 = sand.u32 %s163, 1
        %s309 = smul.addr %s308, 8
        %s310 = scalar_lea.vmem [#allocation5], %s309
        %p311 = pneg %p202
        %p312 = pneg %p199
        %p313 = scmp.lt.s32.totalorder %s24, 1
        %s314 = scalar_select %p313, %s24, 1
        %s315 = smul.addr %s314, 8
        %s316 = scalar_lea.vmem %s7, %s315
        %p317 = pneg %p228
        %p318 = pneg %p225
        %p319 = scmp.lt.s32.totalorder %s24, 1
        %s320 = scalar_select %p319, %s24, 1
        %s321 = smul.addr %s320, 8
        %s322 = scalar_lea.vmem %s8, %s321
        %p323 = scmp.lt.s32.totalorder %s24, 1
        %s324 = scalar_select %p323, %s24, 1
        %s325 = smul.addr %s324, 4
        %s326 = scalar_lea.vmem %s0, %s325
        %p327 = scmp.lt.s32.totalorder %s24, 1
        %s328 = scalar_select %p327, %s24, 1
        %s329 = smul.addr %s328, 8
        %s330 = scalar_lea.vmem %s7, %s329
        %p331 = scmp.lt.s32.totalorder %s24, 1
        %s332 = scalar_select %p331, %s24, 1
        %s333 = smul.addr %s332, 8
        %s334 = scalar_lea.vmem %s8, %s333
        %v335 = vld [vmem:[%s326] sm:$0xf]
        %v337 = vrot.slane %v335, 4
        %338 = vrot.lane.b32.xlu0 %v337, 127
        %v339 = vpop.permute.xlu0 %338
        %341 = vrot.lane.b32.xlu0 %v335, 126
        %v342 = vpop.permute.xlu0 %341
        %vm343 = vcmask 1043456
        %v344 = vsel %vm343, %v335, %v339
        %v345 = vld [vmem:[%s2] sm:$0xff]
        %v346 = vld [vmem:[%s3] sm:$0xff]
        %348 = vset.pattern.permute.xlu0 0
        %349 = vperm.xlu0 %348, %v346
        %v350 = vpop.permute.xlu0 %349
        %vm352 = vcmask 97280
        %v354 = vsel %vm352, %v345, 0
        %v356 = vsel %vm343, %v342, 0
        %358 = vmatprep.subr.mxu0 0.0
        %359 = vmatpush1.msra.mxu0 %v344
        %360 = vmatprep.subr.mxu0 0.0
        %361 = vmatpush1.msra.mxu0 %v356
        %362 = vmatprep.subr.mxu0 0.0
        %363 = vmatpush1.msra.mxu0 0.0
        %364 = vmatprep.subr.mxu0 0.0
        %365 = vmatpush1.msra.mxu0 0.0
        %366 = vmatprep.subr.mxu0 0.0
        %367 = vmatpush1.msra.mxu0 0.0
        %368 = vmatprep.subr.mxu0 0.0
        %369 = vmatpush1.msra.mxu0 0.0
        %370 = vmatprep.subr.mxu0 0.0
        %371 = vmatpush1.msra.mxu0 0.0
        %372 = vmatprep.subr.mxu0 0.0
        %373 = vmatpush1.msra.mxu0 0.0
        %374 = vmatprep.subr.mxu0 0.0
        %375 = vmatpush1.msra.mxu0 0.0
        %376 = vmatprep.subr.mxu0 0.0
        %377 = vmatpush1.msra.mxu0 0.0
        %378 = vmatprep.subr.mxu0 0.0
        %379 = vmatpush1.msra.mxu0 0.0
        %380 = vmatprep.subr.mxu0 0.0
        %381 = vmatpush1.msra.mxu0 0.0
        %382 = vmatprep.subr.mxu0 0.0
        %383 = vmatpush1.msra.mxu0 0.0
        %384 = vmatprep.subr.mxu0 0.0
        %385 = vmatpush1.msra.mxu0 0.0
        %386 = vmatprep.subr.mxu0 0.0
        %387 = vmatpush1.msra.mxu0 0.0
        %388 = vmatprep.subr.mxu0 0.0
        %389 = vmatpush1.msra.mxu0 0.0
        %390 = vmatprep.subr.mxu0 0.0
        %391 = vmatpush1.msra.mxu0 0.0
        %392 = vmatprep.subr.mxu0 0.0
        %393 = vmatpush1.msra.mxu0 0.0
        %394 = vmatprep.subr.mxu0 0.0
        %395 = vmatpush1.msra.mxu0 0.0
        %396 = vmatprep.subr.mxu0 0.0
        %397 = vmatpush1.msra.mxu0 0.0
        %398 = vmatprep.subr.mxu0 0.0
        %399 = vmatpush1.msra.mxu0 0.0
        %400 = vmatprep.subr.mxu0 0.0
        %401 = vmatpush1.msra.mxu0 0.0
        %402 = vmatprep.subr.mxu0 0.0
        %403 = vmatpush1.msra.mxu0 0.0
        %404 = vmatprep.subr.mxu0 0.0
        %405 = vmatpush1.msra.mxu0 0.0
        %406 = vmatprep.subr.mxu0 0.0
        %407 = vmatpush1.msra.mxu0 0.0
        %408 = vmatprep.subr.mxu0 0.0
        %409 = vmatpush1.msra.mxu0 0.0
        %410 = vmatprep.subr.mxu0 0.0
        %411 = vmatpush1.msra.mxu0 0.0
        %412 = vmatprep.subr.mxu0 0.0
        %413 = vmatpush1.msra.mxu0 0.0
        %414 = vmatprep.subr.mxu0 0.0
        %415 = vmatpush1.msra.mxu0 0.0
        %416 = vmatprep.subr.mxu0 0.0
        %417 = vmatpush1.msra.mxu0 0.0
        %418 = vmatprep.subr.mxu0 0.0
        %419 = vmatpush1.msra.mxu0 0.0
        %420 = vmatprep.subr.mxu0 0.0
        %421 = vmatpush1.msra.mxu0 0.0
        %422 = vmatprep.mubr.f32.mxu0 0.0
        %423 = vmatmul.mubr.f32.gmra.mrb[0].mxu0 %v354
        %v424 = vpop.f32.mrb[0].mxu0
        %v425 = vadd.f32 %v350, %v424
        %v426 = vpop.f32.mrb[0].mxu0
        %427 = vdwg.mxu0
        %v428 = vmax.f32 %v425, 0.0
        %v429 = vld [vmem:[#allocation2] sm:$0x1]
        %v431 = vlaneseq
        %v432 = vshrl.u32 %v431, 7
        %v433 = vsub.s32 0, %v432
        %v434 = vrot.slane %v429, %v433
        %v436 = vmul.f32 %v428, %v434
        %438 = vrot.lane.b32.xlu0 %v436, 127
        %v439 = vpop.permute.xlu0 %438
        %441 = vrot.lane.b32.xlu0 %v436, 126
        %v442 = vpop.permute.xlu0 %441
        %v444 = vld [vmem:[%s4] sm:$0xff]
        %v445 = vld [vmem:[%s5] sm:$0xff]
        %447 = vset.pattern.permute.xlu0 0
        %448 = vperm.xlu0 %447, %v445
        %v449 = vpop.permute.xlu0 %448
        %vm451 = vcmask 195584
        %v453 = vsel %vm451, %v444, 0
        %455 = vmatprep.subr.mxu0 0.0
        %456 = vmatpush1.msra.mxu0 %v436
        %457 = vmatprep.subr.mxu0 0.0
        %458 = vmatpush1.msra.mxu0 %v439
        %459 = vmatprep.subr.mxu0 0.0
        %460 = vmatpush1.msra.mxu0 %v442
        %461 = vmatprep.subr.mxu0 0.0
        %462 = vmatpush1.msra.mxu0 0.0
        %463 = vmatprep.subr.mxu0 0.0
        %464 = vmatpush1.msra.mxu0 0.0
        %465 = vmatprep.subr.mxu0 0.0
        %466 = vmatpush1.msra.mxu0 0.0
        %467 = vmatprep.subr.mxu0 0.0
        %468 = vmatpush1.msra.mxu0 0.0
        %469 = vmatprep.subr.mxu0 0.0
        %470 = vmatpush1.msra.mxu0 0.0
        %471 = vmatprep.subr.mxu0 0.0
        %472 = vmatpush1.msra.mxu0 0.0
        %473 = vmatprep.subr.mxu0 0.0
        %474 = vmatpush1.msra.mxu0 0.0
        %475 = vmatprep.subr.mxu0 0.0
        %476 = vmatpush1.msra.mxu0 0.0
        %477 = vmatprep.subr.mxu0 0.0
        %478 = vmatpush1.msra.mxu0 0.0
        %479 = vmatprep.subr.mxu0 0.0
        %480 = vmatpush1.msra.mxu0 0.0
        %481 = vmatprep.subr.mxu0 0.0
        %482 = vmatpush1.msra.mxu0 0.0
        %483 = vmatprep.subr.mxu0 0.0
        %484 = vmatpush1.msra.mxu0 0.0
        %485 = vmatprep.subr.mxu0 0.0
        %486 = vmatpush1.msra.mxu0 0.0
        %487 = vmatprep.subr.mxu0 0.0
        %488 = vmatpush1.msra.mxu0 0.0
        %489 = vmatprep.subr.mxu0 0.0
        %490 = vmatpush1.msra.mxu0 0.0
        %491 = vmatprep.subr.mxu0 0.0
        %492 = vmatpush1.msra.mxu0 0.0
        %493 = vmatprep.subr.mxu0 0.0
        %494 = vmatpush1.msra.mxu0 0.0
        %495 = vmatprep.subr.mxu0 0.0
        %496 = vmatpush1.msra.mxu0 0.0
        %497 = vmatprep.subr.mxu0 0.0
        %498 = vmatpush1.msra.mxu0 0.0
        %499 = vmatprep.subr.mxu0 0.0
        %500 = vmatpush1.msra.mxu0 0.0
        %501 = vmatprep.subr.mxu0 0.0
        %502 = vmatpush1.msra.mxu0 0.0
        %503 = vmatprep.subr.mxu0 0.0
        %504 = vmatpush1.msra.mxu0 0.0
        %505 = vmatprep.subr.mxu0 0.0
        %506 = vmatpush1.msra.mxu0 0.0
        %507 = vmatprep.subr.mxu0 0.0
        %508 = vmatpush1.msra.mxu0 0.0
        %509 = vmatprep.subr.mxu0 0.0
        %510 = vmatpush1.msra.mxu0 0.0
        %511 = vmatprep.subr.mxu0 0.0
        %512 = vmatpush1.msra.mxu0 0.0
        %513 = vmatprep.subr.mxu0 0.0
        %514 = vmatpush1.msra.mxu0 0.0
        %515 = vmatprep.subr.mxu0 0.0
        %516 = vmatpush1.msra.mxu0 0.0
        %517 = vmatprep.subr.mxu0 0.0
        %518 = vmatpush1.msra.mxu0 0.0
        %519 = vmatprep.mubr.f32.mxu0 0.0
        %520 = vmatmul.mubr.f32.gmra.mrb[0].mxu0 %v453
        %v521 = vpop.f32.mrb[0].mxu0
        %v522 = vadd.f32 %v449, %v521
        %v523 = vpop.f32.mrb[0].mxu0
        %524 = vdwg.mxu0
        %v525 = vmax.f32 %v522, 0.0
        %526 = vrot.lane.b32.xlu0 %v434, 127
        %v527 = vpop.permute.xlu0 %526
        %v529 = vmul.f32 %v525, %v527
        %vm530 = vcmask 293888
        %531 = vst.msk [vmem:[%s310] sm:$0xff] %vm530, %v529
        %vm532 = vcmask 326944
        %533 = vst.msk [vmem:[%s310] sm:$0xff] %vm532, 0.0
        %v535 = vsel %vm530, %v529, 0
        %v538 = vsel %vm343, 1.0, 0
        %540 = vmatprep.subr.mxu0 0.0
        %541 = vmatpush1.msra.mxu0 1.0
        %542 = vmatprep.subr.mxu0 0.0
        %543 = vmatpush1.msra.mxu0 1.0
        %544 = vmatprep.subr.mxu0 0.0
        %545 = vmatpush1.msra.mxu0 1.0
        %546 = vmatprep.subr.mxu0 0.0
        %547 = vmatpush1.msra.mxu0 1.0
        %548 = vmatprep.subr.mxu0 0.0
        %549 = vmatpush1.msra.mxu0 %v538
        %550 = vmatprep.subr.mxu0 0.0
        %551 = vmatpush1.msra.mxu0 0.0
        %552 = vmatprep.subr.mxu0 0.0
        %553 = vmatpush1.msra.mxu0 0.0
        %554 = vmatprep.subr.mxu0 0.0
        %555 = vmatpush1.msra.mxu0 0.0
        %556 = vmatprep.subr.mxu0 0.0
        %557 = vmatpush1.msra.mxu0 0.0
        %558 = vmatprep.subr.mxu0 0.0
        %559 = vmatpush1.msra.mxu0 0.0
        %560 = vmatprep.subr.mxu0 0.0
        %561 = vmatpush1.msra.mxu0 0.0
        %562 = vmatprep.subr.mxu0 0.0
        %563 = vmatpush1.msra.mxu0 0.0
        %564 = vmatprep.subr.mxu0 0.0
        %565 = vmatpush1.msra.mxu0 0.0
        %566 = vmatprep.subr.mxu0 0.0
        %567 = vmatpush1.msra.mxu0 0.0
        %568 = vmatprep.subr.mxu0 0.0
        %569 = vmatpush1.msra.mxu0 0.0
        %570 = vmatprep.subr.mxu0 0.0
        %571 = vmatpush1.msra.mxu0 0.0
        %572 = vmatprep.subr.mxu0 0.0
        %573 = vmatpush1.msra.mxu0 0.0
        %574 = vmatprep.subr.mxu0 0.0
        %575 = vmatpush1.msra.mxu0 0.0
        %576 = vmatprep.subr.mxu0 0.0
        %577 = vmatpush1.msra.mxu0 0.0
        %578 = vmatprep.subr.mxu0 0.0
        %579 = vmatpush1.msra.mxu0 0.0
        %580 = vmatprep.subr.mxu0 0.0
        %581 = vmatpush1.msra.mxu0 0.0
        %582 = vmatprep.subr.mxu0 0.0
        %583 = vmatpush1.msra.mxu0 0.0
        %584 = vmatprep.subr.mxu0 0.0
        %585 = vmatpush1.msra.mxu0 0.0
        %586 = vmatprep.subr.mxu0 0.0
        %587 = vmatpush1.msra.mxu0 0.0
        %588 = vmatprep.subr.mxu0 0.0
        %589 = vmatpush1.msra.mxu0 0.0
        %590 = vmatprep.subr.mxu0 0.0
        %591 = vmatpush1.msra.mxu0 0.0
        %592 = vmatprep.subr.mxu0 0.0
        %593 = vmatpush1.msra.mxu0 0.0
        %594 = vmatprep.subr.mxu0 0.0
        %595 = vmatpush1.msra.mxu0 0.0
        %596 = vmatprep.subr.mxu0 0.0
        %597 = vmatpush1.msra.mxu0 0.0
        %598 = vmatprep.subr.mxu0 0.0
        %599 = vmatpush1.msra.mxu0 0.0
        %600 = vmatprep.subr.mxu0 0.0
        %601 = vmatpush1.msra.mxu0 0.0
        %602 = vmatprep.subr.mxu0 0.0
        %603 = vmatpush1.msra.mxu0 0.0
        %604 = vmatprep.mubr.f32.mxu0 0.0
        %605 = vmatmul.mubr.f32.gmra.mrb[0].mxu0 %v535
        %v606 = vpop.f32.mrb[0].mxu0
        %v607 = vadd.f32 0.0, %v606
        %v608 = vpop.f32.mrb[0].mxu0
        %609 = vdwg.mxu0
        %vm610 = vcmask 7168
        %611 = vst.msk [vmem:[%s330] sm:$0xff] %vm610, %v607
        %v612 = vmul.f32 %v529, %v529
        %v614 = vsel %vm530, %v612, 0
        %616 = vmatprep.subr.mxu0 0.0
        %617 = vmatpush1.msra.mxu0 1.0
        %618 = vmatprep.subr.mxu0 0.0
        %619 = vmatpush1.msra.mxu0 1.0
        %620 = vmatprep.subr.mxu0 0.0
        %621 = vmatpush1.msra.mxu0 1.0
        %622 = vmatprep.subr.mxu0 0.0
        %623 = vmatpush1.msra.mxu0 1.0
        %624 = vmatprep.subr.mxu0 0.0
        %625 = vmatpush1.msra.mxu0 %v538
        %626 = vmatprep.subr.mxu0 0.0
        %627 = vmatpush1.msra.mxu0 0.0
        %628 = vmatprep.subr.mxu0 0.0
        %629 = vmatpush1.msra.mxu0 0.0
        %630 = vmatprep.subr.mxu0 0.0
        %631 = vmatpush1.msra.mxu0 0.0
        %632 = vmatprep.subr.mxu0 0.0
        %633 = vmatpush1.msra.mxu0 0.0
        %634 = vmatprep.subr.mxu0 0.0
        %635 = vmatpush1.msra.mxu0 0.0
        %636 = vmatprep.subr.mxu0 0.0
        %637 = vmatpush1.msra.mxu0 0.0
        %638 = vmatprep.subr.mxu0 0.0
        %639 = vmatpush1.msra.mxu0 0.0
        %640 = vmatprep.subr.mxu0 0.0
        %641 = vmatpush1.msra.mxu0 0.0
        %642 = vmatprep.subr.mxu0 0.0
        %643 = vmatpush1.msra.mxu0 0.0
        %644 = vmatprep.subr.mxu0 0.0
        %645 = vmatpush1.msra.mxu0 0.0
        %646 = vmatprep.subr.mxu0 0.0
        %647 = vmatpush1.msra.mxu0 0.0
        %648 = vmatprep.subr.mxu0 0.0
        %649 = vmatpush1.msra.mxu0 0.0
        %650 = vmatprep.subr.mxu0 0.0
        %651 = vmatpush1.msra.mxu0 0.0
        %652 = vmatprep.subr.mxu0 0.0
        %653 = vmatpush1.msra.mxu0 0.0
        %654 = vmatprep.subr.mxu0 0.0
        %655 = vmatpush1.msra.mxu0 0.0
        %656 = vmatprep.subr.mxu0 0.0
        %657 = vmatpush1.msra.mxu0 0.0
        %658 = vmatprep.subr.mxu0 0.0
        %659 = vmatpush1.msra.mxu0 0.0
        %660 = vmatprep.subr.mxu0 0.0
        %661 = vmatpush1.msra.mxu0 0.0
        %662 = vmatprep.subr.mxu0 0.0
        %663 = vmatpush1.msra.mxu0 0.0
        %664 = vmatprep.subr.mxu0 0.0
        %665 = vmatpush1.msra.mxu0 0.0
        %666 = vmatprep.subr.mxu0 0.0
        %667 = vmatpush1.msra.mxu0 0.0
        %668 = vmatprep.subr.mxu0 0.0
        %669 = vmatpush1.msra.mxu0 0.0
        %670 = vmatprep.subr.mxu0 0.0
        %671 = vmatpush1.msra.mxu0 0.0
        %672 = vmatprep.subr.mxu0 0.0
        %673 = vmatpush1.msra.mxu0 0.0
        %674 = vmatprep.subr.mxu0 0.0
        %675 = vmatpush1.msra.mxu0 0.0
        %676 = vmatprep.subr.mxu0 0.0
        %677 = vmatpush1.msra.mxu0 0.0
        %678 = vmatprep.subr.mxu0 0.0
        %679 = vmatpush1.msra.mxu0 0.0
        %680 = vmatprep.mubr.f32.mxu0 0.0
        %681 = vmatmul.mubr.f32.gmra.mrb[0].mxu0 %v614
        %v682 = vpop.f32.mrb[0].mxu0
        %v683 = vadd.f32 0.0, %v682
        %v684 = vpop.f32.mrb[0].mxu0
        %685 = vdwg.mxu0
        %686 = vst.msk [vmem:[%s334] sm:$0xff] %vm610, %v683
        %s687 = sand.u32 %s163, 1
        %s688 = scalar_lea.sflag [#allocation4], %s687
        %s689 = sand.u32 %s163, 1
        %s690 = smul.addr %s689, 8
        %s691 = scalar_lea.vmem [#allocation5], %s690
        %p692 = scmp.lt.s32.totalorder %s24, 1
        %s693 = scalar_select %p692, %s24, 1
        %s694 = smul.addr %s693, 8
        %s695 = scalar_lea.vmem %s7, %s694
        %p696 = scmp.lt.s32.totalorder %s24, 1
        %s697 = scalar_select %p696, %s24, 1
        %s698 = smul.addr %s697, 8
        %s699 = scalar_lea.vmem %s8, %s698
        // Predicated region
        $region49: #{tpu_custom_call.1} parent=43 // pred_check
          %p700 = pneg %p173
        $region50: #{tpu_custom_call.1} parent=43 // pred_check_branch
          %702 = sbr.rel (%p700) target = $region52
        $region51: #{tpu_custom_call.1} parent=43 // pred_region
          %s704 = ssub.s32 128, 128
          %705 = vsyncadd %s688, %s704
          %s706 = smul.addr %s24, 128
          %s707 = scalar_lea.hbm %s6, %s706
          %s709 = sshll.u32 %s691, 4
          %s710 = int_to_ptr.vmem [resolvable:$true] %s709
          %712 = dma.vmem_to_hbm [thread:$0]  %s710, 128, %s707, %s688
        $region52: #{tpu_custom_call.1} parent=43 // pred_fallthru
          _
        // Predicated region
        $region53: #{tpu_custom_call.1} parent=43 // pred_check
          %p713 = pneg %p199
        $region54: #{tpu_custom_call.1} parent=43 // pred_check_branch
          %715 = sbr.rel (%p713) target = $region56
        $region55: #{tpu_custom_call.1} parent=43 // pred_region
          _
        $region56: #{tpu_custom_call.1} parent=43 // pred_fallthru
          _
        // Predicated region
        $region57: #{tpu_custom_call.1} parent=43 // pred_check
          %p716 = pneg %p225
        $region58: #{tpu_custom_call.1} parent=43 // pred_check_branch
          %718 = sbr.rel (%p716) target = $region60
        $region59: #{tpu_custom_call.1} parent=43 // pred_region
          _
        $region60: #{tpu_custom_call.1} parent=43 // pred_fallthru
          _
      $region44: #{tpu_custom_call.1} parent=5 // pred_fallthru
        _
      %p719 = scmp.le.s32.totalorder 2, %s19
      // Predicated region
      $region61: #{tpu_custom_call.1} parent=5 // pred_check
        %p720 = pneg %p719
      $region62: #{tpu_custom_call.1} parent=5 // pred_check_branch
        %722 = sbr.rel (%p720) target = $region64
      $region63: #{tpu_custom_call.1} parent=5 // pred_region
        %s723 = ssub.s32 %s19, 2
        // Predicated region
        $region65: #{tpu_custom_call.1} parent=63 // pred_check
          %p724 = pneg %p179
        $region66: #{tpu_custom_call.1} parent=63 // pred_check_branch
          %726 = sbr.rel (%p724) target = $region68
        $region67: #{tpu_custom_call.1} parent=63 // pred_region
          %s727 = sand.u32 %s164, 1
          %s728 = scalar_lea.sflag [#allocation4], %s727
          %s729 = sand.u32 %s164, 1
          %s730 = smul.addr %s729, 8
          %s731 = scalar_lea.vmem [#allocation5], %s730
          %732 = dma.done %s728, 128
        $region68: #{tpu_custom_call.1} parent=63 // pred_fallthru
          _
        // Predicated region
        $region69: #{tpu_custom_call.1} parent=63 // pred_check
          %p733 = pneg %p205
        $region70: #{tpu_custom_call.1} parent=63 // pred_check_branch
          %735 = sbr.rel (%p733) target = $region72
        $region71: #{tpu_custom_call.1} parent=63 // pred_region
          %p736 = scmp.lt.s32.totalorder %s25, 1
          %s737 = scalar_select %p736, %s25, 1
          %s738 = smul.addr %s737, 8
          %s739 = scalar_lea.vmem %s7, %s738
        $region72: #{tpu_custom_call.1} parent=63 // pred_fallthru
          _
        // Predicated region
        $region73: #{tpu_custom_call.1} parent=63 // pred_check
          %p740 = pneg %p231
        $region74: #{tpu_custom_call.1} parent=63 // pred_check_branch
          %742 = sbr.rel (%p740) target = $region76
        $region75: #{tpu_custom_call.1} parent=63 // pred_region
          %p743 = scmp.lt.s32.totalorder %s25, 1
          %s744 = scalar_select %p743, %s25, 1
          %s745 = smul.addr %s744, 8
          %s746 = scalar_lea.vmem %s8, %s745
        $region76: #{tpu_custom_call.1} parent=63 // pred_fallthru
          _
      $region64: #{tpu_custom_call.1} parent=5 // pred_fallthru
        _
    $region6: #{tpu_custom_call.1} parent=1 // loop_footer
      %s23 = sadd.s32 1, %s19
    $region7: #{tpu_custom_call.1} parent=1 // loop_footer_branch
      %18 = sbr.rel target = $region3
    $region8: #{tpu_custom_call.1} parent=1 // loop_exit
      _
    %747 = vsyncpa [#allocation3], 1
    %s748 = scalar_lea.sflag [#allocation3], 1
    %749 = vsyncpa %s748, 1
    %750 = vsyncpa [#allocation4], 1
    %s751 = scalar_lea.sflag [#allocation4], 1
    %752 = vsyncpa %s751, 1

</llo_original>
